<compile_context>
chip_gen: v6e
topology: v6e:2x2x1
jax: 0.10.0
libtpu: 0.0.40
codegen_flags: <defaults>
</compile_context>

<pallas_src>
from functools import partial

import jax
import jax.numpy as jnp
from jax.experimental import pallas as pl
from jax.experimental.pallas import tpu as pltpu


def _small_matmul(a, b):
    """(M, K) @ (K, N) for tiny K/N via VPU broadcast-FMAs (skip the MXU)."""
    out = jnp.zeros((a.shape[0], b.shape[1]), jnp.float32)
    for k in range(a.shape[1]):          # K is a small static Python int
        out = out + a[:, k:k + 1] * b[k:k + 1, :]
    return out


def squeeze_gate_kernel(x_ref, w0_ref, b0_ref, w1_ref, b1_ref, gate_ref, acc_ref,
                        *, inv_hw):
    """Pass 1: cross-tile spatial-sum reduction + tiny excitation MLP + sigmoid.

    x_ref   : (N, C, TS)   lane-dense spatial tile of the input
    w0_ref  : (C, Cmid)    fc.weight^T      b0_ref: (1, Cmid)
    w1_ref  : (Cmid, C)    fc1.weight^T     b1_ref: (1, C)
    gate_ref: (N, C)       sigmoid gate (written at the last grid step)
    acc_ref : (N, C)       f32 VMEM scratch, persists across the grid
    """
    step = pl.program_id(0)

    @pl.when(step == 0)
    def _():
        acc_ref[...] = jnp.zeros_like(acc_ref)

    # per-tile partial spatial sum (cross-lane reduce on a lane-dense tile)
    acc_ref[...] += jnp.sum(x_ref[...].astype(jnp.float32), axis=-1)

    @pl.when(step == pl.num_programs(0) - 1)
    def _():
        sq = acc_ref[...] * inv_hw                               # (N, C) spatial mean
        h = _small_matmul(sq, w0_ref[...]) + b0_ref[...]         # FC (fc)
        h = jnp.maximum(h, 0.0)                                  # relu=True
        e = _small_matmul(h, w1_ref[...]) + b1_ref[...]          # FC (fc1), relu=False
        gate_ref[...] = 1.0 / (1.0 + jnp.exp(-e))                # sigmoid


def scale_kernel(gate_ref, x_ref, o_ref):
    """Pass 2: out = x * gate, gate broadcast over the lane-dense spatial axis."""
    o_ref[...] = (x_ref[...].astype(jnp.float32) * gate_ref[...]).astype(o_ref.dtype)


def _pick_spatial_tile(hw, max_lanes=2048):
    """Largest multiple of 128 that divides hw (capped), else the full extent."""
    best = 0
    cand = 128
    while cand <= min(hw, max_lanes):
        if hw % cand == 0:
            best = cand
        cand += 128
    return best if best > 0 else hw


def squeeze_ex_forward(x_nchw, w0, b0, w1, b1):
    """JAX wrapper matching SqueezeEx.forward semantics.

    x_nchw : (N, C, H, W)
    w0     : (Cmid, C)  = self.fc.fc.weight      b0 : (Cmid,) = self.fc.fc.bias
    w1     : (C, Cmid)  = self.fc1.fc.weight     b1 : (C,)    = self.fc1.fc.bias
    returns: (N, C, H, W)
    """
    N, C, H, W = x_nchw.shape
    Cmid = w0.shape[0]
    # torch's ex.view(-1, squeeze.size()[-1], 1, 1) only broadcasts when outs == inputs
    assert w0.shape == (Cmid, C) and w1.shape == (C, Cmid)

    HW = H * W
    TS = _pick_spatial_tile(HW)
    nt = HW // TS

    x3 = x_nchw.reshape(N, C, HW).astype(jnp.float32)
    w0t = jnp.transpose(w0).astype(jnp.float32)        # (C, Cmid)
    w1t = jnp.transpose(w1).astype(jnp.float32)        # (Cmid, C)
    b0r = b0.reshape(1, Cmid).astype(jnp.float32)
    b1r = b1.reshape(1, C).astype(jnp.float32)

    # ---- pass 1: spatial mean (cross-tile reduction) + excitation MLP + sigmoid ----
    gate = pl.pallas_call(
        partial(squeeze_gate_kernel, inv_hw=1.0 / HW),
        grid=(nt,),
        in_specs=[
            pl.BlockSpec((N, C, TS), lambda s: (0, 0, s)),
            pl.BlockSpec((C, Cmid), lambda s: (0, 0)),
            pl.BlockSpec((1, Cmid), lambda s: (0, 0)),
            pl.BlockSpec((Cmid, C), lambda s: (0, 0)),
            pl.BlockSpec((1, C), lambda s: (0, 0)),
        ],
        out_specs=pl.BlockSpec((N, C), lambda s: (0, 0)),
        out_shape=jax.ShapeDtypeStruct((N, C), jnp.float32),
        scratch_shapes=[pltpu.VMEM((N, C), jnp.float32)],
        compiler_params=pltpu.CompilerParams(dimension_semantics=("arbitrary",)),
    )(x3, w0t, b0r, w1t, b1r)

    # ---- pass 2: lane-dense broadcast channel reweighting (pipelined, parallel) ----
    out3 = pl.pallas_call(
        scale_kernel,
        grid=(nt,),
        in_specs=[
            pl.BlockSpec((N, C, 1), lambda s: (0, 0, 0)),
            pl.BlockSpec((N, C, TS), lambda s: (0, 0, s)),
        ],
        out_specs=pl.BlockSpec((N, C, TS), lambda s: (0, 0, s)),
        out_shape=jax.ShapeDtypeStruct((N, C, HW), x_nchw.dtype),
        compiler_params=pltpu.CompilerParams(dimension_semantics=("parallel",)),
    )(gate.reshape(N, C, 1), x3)

    return out3.reshape(N, C, H, W)


def _reference(x, w0, b0, w1, b1):
    """Pure-JAX/XLA reference of the same forward pass (sanity check)."""
    sq = x.mean(axis=(2, 3))                                   # (N, C)
    h = jnp.maximum(sq @ w0.T + b0, 0.0)                       # FC + relu
    e = h @ w1.T + b1                                          # FC1 (no relu)
    gate = 1.0 / (1.0 + jnp.exp(-e))                           # sigmoid
    return x * gate[:, :, None, None]


if __name__ == "__main__":
    def run_case(key, N, C, H, W, ratio):
        Cmid = int(C / ratio)
        kx, k0, k1 = jax.random.split(key, 3)
        x = jax.random.normal(kx, (N, C, H, W), jnp.float32)
        # nn.init.normal_ weights, bias_init_val = 0.0
        w0 = jax.random.normal(k0, (Cmid, C), jnp.float32)
        b0 = jnp.zeros((Cmid,), jnp.float32)
        w1 = jax.random.normal(k1, (C, Cmid), jnp.float32)
        b1 = jnp.zeros((C,), jnp.float32)

        out = jax.block_until_ready(squeeze_ex_forward(x, w0, b0, w1, b1))
        assert out.shape == (N, C, H, W), out.shape
        ref = _reference(x, w0, b0, w1, b1)
        err = float(jnp.max(jnp.abs(out - ref)))
        assert jnp.allclose(out, ref, atol=1e-4, rtol=1e-4), err

    key = jax.random.PRNGKey(0)
    ka, kb = jax.random.split(key)
    # SqueezeEx(inputs=4, outs=4, ratio=2) on (2, 4, 16, 16): single-tile grid
    run_case(ka, 2, 4, 16, 16, 2)
    # larger spatial extent exercises the multi-step cross-tile reduction and the
    # multi-tile parallel scaling pass
    run_case(kb, 2, 4, 64, 64, 2)

    print("KERNEL_OK")
</pallas_src>

<mosaic_0001>
module attributes {stable_mosaic.version = 11 : i64} {
  func.func @squeeze_gate_kernel(%arg0: i32, %arg1: memref<2x4x256xf32, #tpu.memory_space<vmem>>, %arg2: memref<4x2xf32, #tpu.memory_space<vmem>>, %arg3: memref<1x2xf32, #tpu.memory_space<vmem>>, %arg4: memref<2x4xf32, #tpu.memory_space<vmem>>, %arg5: memref<1x4xf32, #tpu.memory_space<vmem>>, %arg6: memref<2x4xf32, #tpu.memory_space<vmem>>, %arg7: memref<2x4xf32, #tpu.memory_space<vmem>>) attributes {dimension_semantics = [#tpu.dimension_semantics<arbitrary>], iteration_bounds = array<i64: 1>, scalar_prefetch = 0 : i64, scratch_operands = 1 : i64, tpu.core_type = #tpu.core_type<tc>, window_params = [{transform_indices = @transform_0, window_bounds = array<i64: 2, 4, 256>}, {pipeline_mode = #tpu.pipeline_mode<synchronous>, transform_indices = @transform_1, window_bounds = array<i64: 4, 2>}, {pipeline_mode = #tpu.pipeline_mode<synchronous>, transform_indices = @transform_2, window_bounds = array<i64: 1, 2>}, {pipeline_mode = #tpu.pipeline_mode<synchronous>, transform_indices = @transform_3, window_bounds = array<i64: 2, 4>}, {pipeline_mode = #tpu.pipeline_mode<synchronous>, transform_indices = @transform_4, window_bounds = array<i64: 1, 4>}, {pipeline_mode = #tpu.pipeline_mode<synchronous>, transform_indices = @transform_5, window_bounds = array<i64: 2, 4>}]} {
    %c0_i32 = arith.constant 0 : i32
    %0 = arith.cmpi eq, %arg0, %c0_i32 : i32
    %1 = arith.extui %0 : i1 to i32
    %c0_i32_0 = arith.constant 0 : i32
    %2 = arith.cmpi ne, %1, %c0_i32_0 : i32
    scf.if %2 {
      %cst_9 = arith.constant 0.000000e+00 : f32
      %11 = vector.broadcast %cst_9 : f32 to vector<2x4xf32>
      %c0_10 = arith.constant 0 : index
      %c0_11 = arith.constant 0 : index
      %12 = vector.load %arg7[%c0_10, %c0_11] : memref<2x4xf32, #tpu.memory_space<vmem>>, vector<2x4xf32>
      tpu.vector_store %arg7[%c0_10, %c0_11], %11 {strides = array<i32>} : memref<2x4xf32, #tpu.memory_space<vmem>>, vector<2x4xf32>,
    } else {
    }
    %c0 = arith.constant 0 : index
    %c0_1 = arith.constant 0 : index
    %3 = vector.load %arg7[%c0, %c0_1] : memref<2x4xf32, #tpu.memory_space<vmem>>, vector<2x4xf32>
    %c0_2 = arith.constant 0 : index
    %c0_3 = arith.constant 0 : index
    %c0_4 = arith.constant 0 : index
    %4 = vector.load %arg1[%c0_2, %c0_3, %c0_4] : memref<2x4x256xf32, #tpu.memory_space<vmem>>, vector<2x4x256xf32>
    %cst = arith.constant dense<0.000000e+00> : vector<2x4xf32>
    %5 = vector.multi_reduction <add>, %4, %cst [2] : vector<2x4x256xf32> to vector<2x4xf32>
    %6 = arith.addf %3, %5 : vector<2x4xf32>
    %c0_5 = arith.constant 0 : index
    %c0_6 = arith.constant 0 : index
    %7 = vector.load %arg7[%c0_5, %c0_6] : memref<2x4xf32, #tpu.memory_space<vmem>>, vector<2x4xf32>
    tpu.vector_store %arg7[%c0_5, %c0_6], %6 {strides = array<i32>} : memref<2x4xf32, #tpu.memory_space<vmem>>, vector<2x4xf32>,
    %c0_i32_7 = arith.constant 0 : i32
    %8 = arith.cmpi eq, %arg0, %c0_i32_7 : i32
    %9 = arith.extui %8 : i1 to i32
    %c0_i32_8 = arith.constant 0 : i32
    %10 = arith.cmpi ne, %9, %c0_i32_8 : i32
    scf.if %10 {
      %c0_9 = arith.constant 0 : index
      %c0_10 = arith.constant 0 : index
      %11 = vector.load %arg7[%c0_9, %c0_10] : memref<2x4xf32, #tpu.memory_space<vmem>>, vector<2x4xf32>
      %cst_11 = arith.constant 3.906250e-03 : f32
      %12 = vector.broadcast %cst_11 : f32 to vector<2x4xf32>
      %13 = arith.mulf %11, %12 : vector<2x4xf32>
      %c0_12 = arith.constant 0 : index
      %c0_13 = arith.constant 0 : index
      %14 = vector.load %arg2[%c0_12, %c0_13] : memref<4x2xf32, #tpu.memory_space<vmem>>, vector<4x2xf32>
      %cst_14 = arith.constant 0.000000e+00 : f32
      %15 = vector.broadcast %cst_14 : f32 to vector<2x2xf32>
      %16 = vector.extract_strided_slice %13 {offsets = [0, 0], sizes = [2, 1], strides = [1, 1]} : vector<2x4xf32> to vector<2x1xf32>
      %17 = vector.extract_strided_slice %14 {offsets = [0, 0], sizes = [1, 2], strides = [1, 1]} : vector<4x2xf32> to vector<1x2xf32>
      %18 = vector.broadcast %16 : vector<2x1xf32> to vector<2x2xf32>
      %19 = vector.broadcast %17 : vector<1x2xf32> to vector<2x2xf32>
      %20 = arith.mulf %18, %19 : vector<2x2xf32>
      %21 = arith.addf %15, %20 : vector<2x2xf32>
      %22 = vector.extract_strided_slice %13 {offsets = [0, 1], sizes = [2, 1], strides = [1, 1]} : vector<2x4xf32> to vector<2x1xf32>
      %23 = vector.extract_strided_slice %14 {offsets = [1, 0], sizes = [1, 2], strides = [1, 1]} : vector<4x2xf32> to vector<1x2xf32>
      %24 = vector.broadcast %22 : vector<2x1xf32> to vector<2x2xf32>
      %25 = vector.broadcast %23 : vector<1x2xf32> to vector<2x2xf32>
      %26 = arith.mulf %24, %25 : vector<2x2xf32>
      %27 = arith.addf %21, %26 : vector<2x2xf32>
      %28 = vector.extract_strided_slice %13 {offsets = [0, 2], sizes = [2, 1], strides = [1, 1]} : vector<2x4xf32> to vector<2x1xf32>
      %29 = vector.extract_strided_slice %14 {offsets = [2, 0], sizes = [1, 2], strides = [1, 1]} : vector<4x2xf32> to vector<1x2xf32>
      %30 = vector.broadcast %28 : vector<2x1xf32> to vector<2x2xf32>
      %31 = vector.broadcast %29 : vector<1x2xf32> to vector<2x2xf32>
      %32 = arith.mulf %30, %31 : vector<2x2xf32>
      %33 = arith.addf %27, %32 : vector<2x2xf32>
      %34 = vector.extract_strided_slice %13 {offsets = [0, 3], sizes = [2, 1], strides = [1, 1]} : vector<2x4xf32> to vector<2x1xf32>
      %35 = vector.extract_strided_slice %14 {offsets = [3, 0], sizes = [1, 2], strides = [1, 1]} : vector<4x2xf32> to vector<1x2xf32>
      %36 = vector.broadcast %34 : vector<2x1xf32> to vector<2x2xf32>
      %37 = vector.broadcast %35 : vector<1x2xf32> to vector<2x2xf32>
      %38 = arith.mulf %36, %37 : vector<2x2xf32>
      %39 = arith.addf %33, %38 : vector<2x2xf32>
      %c0_15 = arith.constant 0 : index
      %c0_16 = arith.constant 0 : index
      %40 = vector.load %arg3[%c0_15, %c0_16] : memref<1x2xf32, #tpu.memory_space<vmem>>, vector<1x2xf32>
      %41 = vector.broadcast %40 : vector<1x2xf32> to vector<2x2xf32>
      %42 = arith.addf %39, %41 : vector<2x2xf32>
      %cst_17 = arith.constant 0.000000e+00 : f32
      %43 = vector.broadcast %cst_17 : f32 to vector<2x2xf32>
      %44 = arith.maximumf %42, %43 : vector<2x2xf32>
      %c0_18 = arith.constant 0 : index
      %c0_19 = arith.constant 0 : index
      %45 = vector.load %arg4[%c0_18, %c0_19] : memref<2x4xf32, #tpu.memory_space<vmem>>, vector<2x4xf32>
      %cst_20 = arith.constant 0.000000e+00 : f32
      %46 = vector.broadcast %cst_20 : f32 to vector<2x4xf32>
      %47 = vector.extract_strided_slice %44 {offsets = [0, 0], sizes = [2, 1], strides = [1, 1]} : vector<2x2xf32> to vector<2x1xf32>
      %48 = vector.extract_strided_slice %45 {offsets = [0, 0], sizes = [1, 4], strides = [1, 1]} : vector<2x4xf32> to vector<1x4xf32>
      %49 = vector.broadcast %47 : vector<2x1xf32> to vector<2x4xf32>
      %50 = vector.broadcast %48 : vector<1x4xf32> to vector<2x4xf32>
      %51 = arith.mulf %49, %50 : vector<2x4xf32>
      %52 = arith.addf %46, %51 : vector<2x4xf32>
      %53 = vector.extract_strided_slice %44 {offsets = [0, 1], sizes = [2, 1], strides = [1, 1]} : vector<2x2xf32> to vector<2x1xf32>
      %54 = vector.extract_strided_slice %45 {offsets = [1, 0], sizes = [1, 4], strides = [1, 1]} : vector<2x4xf32> to vector<1x4xf32>
      %55 = vector.broadcast %53 : vector<2x1xf32> to vector<2x4xf32>
      %56 = vector.broadcast %54 : vector<1x4xf32> to vector<2x4xf32>
      %57 = arith.mulf %55, %56 : vector<2x4xf32>
      %58 = arith.addf %52, %57 : vector<2x4xf32>
      %c0_21 = arith.constant 0 : index
      %c0_22 = arith.constant 0 : index
      %59 = vector.load %arg5[%c0_21, %c0_22] : memref<1x4xf32, #tpu.memory_space<vmem>>, vector<1x4xf32>
      %60 = vector.broadcast %59 : vector<1x4xf32> to vector<2x4xf32>
      %61 = arith.addf %58, %60 : vector<2x4xf32>
      %cst_23 = arith.constant 0.000000e+00 : f32
      %62 = vector.broadcast %cst_23 : f32 to vector<2x4xf32>
      %63 = arith.subf %62, %61 : vector<2x4xf32>
      %64 = math.exp %63 : vector<2x4xf32>
      %cst_24 = arith.constant 1.000000e+00 : f32
      %65 = vector.broadcast %cst_24 : f32 to vector<2x4xf32>
      %66 = arith.addf %65, %64 : vector<2x4xf32>
      %cst_25 = arith.constant 1.000000e+00 : f32
      %67 = vector.broadcast %cst_25 : f32 to vector<2x4xf32>
      %68 = arith.divf %67, %66 : vector<2x4xf32>
      %c0_26 = arith.constant 0 : index
      %c0_27 = arith.constant 0 : index
      %69 = vector.load %arg6[%c0_26, %c0_27] : memref<2x4xf32, #tpu.memory_space<vmem>>, vector<2x4xf32>
      tpu.vector_store %arg6[%c0_26, %c0_27], %68 {strides = array<i32>} : memref<2x4xf32, #tpu.memory_space<vmem>>, vector<2x4xf32>,
    } else {
    }
    return
  }
  func.func @transform_0(%arg0: i32) -> (i32, i32, i32) {
    %c0_i32 = arith.constant 0 : i32
    %c0_i32_0 = arith.constant 0 : i32
    %c0_i32_1 = arith.constant 0 : i32
    return %c0_i32, %c0_i32_0, %arg0 : i32, i32, i32
  }
  func.func @transform_1(%arg0: i32) -> (i32, i32) {
    %c0_i32 = arith.constant 0 : i32
    %c0_i32_0 = arith.constant 0 : i32
    %c0_i32_1 = arith.constant 0 : i32
    return %c0_i32, %c0_i32_0 : i32, i32
  }
  func.func @transform_2(%arg0: i32) -> (i32, i32) {
    %c0_i32 = arith.constant 0 : i32
    %c0_i32_0 = arith.constant 0 : i32
    %c0_i32_1 = arith.constant 0 : i32
    return %c0_i32, %c0_i32_0 : i32, i32
  }
  func.func @transform_3(%arg0: i32) -> (i32, i32) {
    %c0_i32 = arith.constant 0 : i32
    %c0_i32_0 = arith.constant 0 : i32
    %c0_i32_1 = arith.constant 0 : i32
    return %c0_i32, %c0_i32_0 : i32, i32
  }
  func.func @transform_4(%arg0: i32) -> (i32, i32) {
    %c0_i32 = arith.constant 0 : i32
    %c0_i32_0 = arith.constant 0 : i32
    %c0_i32_1 = arith.constant 0 : i32
    return %c0_i32, %c0_i32_0 : i32, i32
  }
  func.func @transform_5(%arg0: i32) -> (i32, i32) {
    %c0_i32 = arith.constant 0 : i32
    %c0_i32_0 = arith.constant 0 : i32
    %c0_i32_1 = arith.constant 0 : i32
    return %c0_i32, %c0_i32_0 : i32, i32
  }
}

</mosaic_0001>

<llo_original>
// kernel: tpu_custom_call.1
$region0: #{tpu_custom_call.1}
  #allocation0 [shape = 'u32[]', space=smem, size = 0x4, offset = 0x4, fixed_abs, tag = 'smem constant byte address 0x4 - core index']
  #allocation1 [shape = 'u32[144,128]{1,0:T(1,128)}', space=vmem, size = 0x12000, scoped, tag = 'internal scratch']
  #allocation2 [shape = 'f32[2,4]{1,0:T(2,128)}', space=vmem, size = 0x400, scoped, tag = 'scratch operand']
  %s0 = inlined_call_operand.hbm [shape: f32[2,4,256], index: 0, kind: input, shape index: {}]
  %s1 = inlined_call_operand.vmem [shape: f32[4,2], index: 1, kind: input, shape index: {}]
  %s2 = inlined_call_operand.vmem [shape: f32[1,2], index: 2, kind: input, shape index: {}]
  %s3 = inlined_call_operand.vmem [shape: f32[2,4], index: 3, kind: input, shape index: {}]
  %s4 = inlined_call_operand.vmem [shape: f32[1,4], index: 4, kind: input, shape index: {}]
  %s5 = inlined_call_operand.hbm [shape: f32[2,4], index: 5, kind: output, shape index: {}]
  %s6 = sld [smem:[#allocation0]]
  $region42: #{tpu_custom_call.1} parent=0
    _
  %s8 = ssub.s32 1, %s6
  %s9 = scalar_select 0, %s8, %s6
  $region1: #{tpu_custom_call.1} parent=0
    #allocation3 [shape = 'u8[8192]{0}', space=vmem, size = 0x2000, scoped, tag = 'input window, operand 0, single buffered']
    #allocation4 [shape = 's32[1]{0}', space=sflag, size = 0x4, scoped, tag = 'scoped memory for tpu_custom_call.1']
    #allocation5 [shape = 's32[1]{0}', space=sflag, size = 0x4, scoped, tag = 'scoped memory for tpu_custom_call.1']
    #allocation6 [shape = 'u8[1024]{0}', space=vmem, size = 0x400, scoped, tag = 'output window, operand 0, single buffered']
    %10 = vsyncpa [#allocation4], 0
    %11 = vsyncpa [#allocation5], 0
    // Predicated region
    $region2: #{tpu_custom_call.1} parent=1 // pred_check
      _
    $region3: #{tpu_custom_call.1} parent=1 // pred_check_branch
      %13 = sbr.rel (0) target = $region5
    $region4: #{tpu_custom_call.1} parent=1 // pred_region
      %s15 = ssub.s32 256, 256
      %16 = vsyncadd [#allocation4], %s15
      %s17 = sshll.u32 [#allocation3], 4
      %s18 = int_to_ptr.vmem [resolvable:$true] %s17
      %23 = dma.hbm_to_vmem [thread:$0]  %s0, 256, %s18, [#allocation4], 128, 128, 8
    $region5: #{tpu_custom_call.1} parent=1 // pred_fallthru
      _
    // Predicated region
    $region6: #{tpu_custom_call.1} parent=1 // pred_check
      _
    $region7: #{tpu_custom_call.1} parent=1 // pred_check_branch
      %25 = sbr.rel (0) target = $region9
    $region8: #{tpu_custom_call.1} parent=1 // pred_region
      _
    $region9: #{tpu_custom_call.1} parent=1 // pred_fallthru
      _
    // Predicated region
    $region10: #{tpu_custom_call.1} parent=1 // pred_check
      _
    $region11: #{tpu_custom_call.1} parent=1 // pred_check_branch
      %27 = sbr.rel (0) target = $region13
    $region12: #{tpu_custom_call.1} parent=1 // pred_region
      _
    $region13: #{tpu_custom_call.1} parent=1 // pred_fallthru
      _
    // Predicated region
    $region14: #{tpu_custom_call.1} parent=1 // pred_check
      _
    $region15: #{tpu_custom_call.1} parent=1 // pred_check_branch
      %29 = sbr.rel (0) target = $region17
    $region16: #{tpu_custom_call.1} parent=1 // pred_region
      _
    $region17: #{tpu_custom_call.1} parent=1 // pred_fallthru
      _
    // Predicated region
    $region18: #{tpu_custom_call.1} parent=1 // pred_check
      _
    $region19: #{tpu_custom_call.1} parent=1 // pred_check_branch
      %31 = sbr.rel (0) target = $region21
    $region20: #{tpu_custom_call.1} parent=1 // pred_region
      _
    $region21: #{tpu_custom_call.1} parent=1 // pred_fallthru
      _
    // Predicated region
    $region22: #{tpu_custom_call.1} parent=1 // pred_check
      _
    $region23: #{tpu_custom_call.1} parent=1 // pred_check_branch
      %33 = sbr.rel (0) target = $region25
    $region24: #{tpu_custom_call.1} parent=1 // pred_region
      %34 = dma.done [#allocation4], 256
    $region25: #{tpu_custom_call.1} parent=1 // pred_fallthru
      _
    %p35 = scmp.eq.s32.totalorder 0, 0
    // Predicated region
    $region26: #{tpu_custom_call.1} parent=1 // pred_check
      %p36 = pneg %p35
    $region27: #{tpu_custom_call.1} parent=1 // pred_check_branch
      %38 = sbr.rel (%p36) target = $region29
    $region28: #{tpu_custom_call.1} parent=1 // pred_region
      %vm39 = vcmask 25600
      %40 = vst.msk [vmem:[#allocation2] sm:$0x3] %vm39, 0.0
    $region29: #{tpu_custom_call.1} parent=1 // pred_fallthru
      _
    %v41 = vld [vmem:[#allocation2] sm:$0x3]
    %v42 = vld [vmem:[#allocation3] sm:$0xff]
    %v43 = vld [vmem:[#allocation3 + $0x8] sm:$0xff]
    %v46 = vcombine.high %v42, %v42
    %v47 = vcombine.high %v43, %v43
    %vm50 = vcmask 1043456
    %v51 = vsel %vm50, %v42, 0.0
    %v52 = vsel %vm50, %v46, 0.0
    %v53 = vadd.f32 %v51, %v52
    %54 = vadd.xlane.f32.xlu0 %v53
    %v55 = vpop.xlane.xlu0 %54
    %v56 = vsel %vm50, %v43, 0.0
    %v57 = vsel %vm50, %v47, 0.0
    %v58 = vadd.f32 %v56, %v57
    %59 = vadd.xlane.f32.xlu0 %v58
    %v60 = vpop.xlane.xlu0 %59
    %v63 = vlaneseq
    %v64 = vand.u32 %v63, 127
    %v65 = vlaneseq
    %v66 = vshrl.u32 %v65, 7
    %v67 = vsub.s32 %v64, %v66
    %v68 = vrot.slane %v55, %v67
    %v69 = vlaneseq
    %v70 = vshrl.u32 %v69, 7
    %v71 = vsub.s32 %v64, %v70
    %v72 = vrot.slane %v60, %v71
    %vm73 = vcmask 1041409
    %v74 = vsel %vm73, %v72, %v68
    %v76 = vadd.f32 %v41, %v74
    %vm77 = vcmask 25600
    %78 = vst.msk [vmem:[#allocation2] sm:$0x3] %vm77, %v76
    // Predicated region
    $region30: #{tpu_custom_call.1} parent=1 // pred_check
      %p79 = pneg %p35
    $region31: #{tpu_custom_call.1} parent=1 // pred_check_branch
      %81 = sbr.rel (%p79) target = $region33
    $region32: #{tpu_custom_call.1} parent=1 // pred_region
      %v82 = vld [vmem:[#allocation2] sm:$0x3]
      %v83 = vmul.f32 %v82, 0.00390625
      %v84 = vld [vmem:[%s1] sm:$0xf]
      %86 = vset.pattern.permute.xlu0 0
      %87 = vperm.xlu0 %86, %v83
      %v88 = vpop.permute.xlu0 %87
      %v90 = vlaneseq
      %v91 = vshrl.u32 %v90, 7
      %v92 = vsub.s32 0, %v91
      %v93 = vrot.slane %v84, %v92
      %v94 = vmul.f32 %v88, %v93
      %v95 = vadd.f32 %v94, 0.0
      %96 = vset.pattern.permute.xlu0 1
      %97 = vperm.xlu0 %96, %v83
      %v98 = vpop.permute.xlu0 %97
      %v100 = vlaneseq
      %v101 = vshrl.u32 %v100, 7
      %v102 = vsub.s32 1, %v101
      %v103 = vrot.slane %v84, %v102
      %v104 = vmul.f32 %v98, %v103
      %v105 = vadd.f32 %v95, %v104
      %106 = vset.pattern.permute.xlu0 2
      %107 = vperm.xlu0 %106, %v83
      %v108 = vpop.permute.xlu0 %107
      %v110 = vlaneseq
      %v111 = vshrl.u32 %v110, 7
      %v112 = vsub.s32 2, %v111
      %v113 = vrot.slane %v84, %v112
      %v114 = vmul.f32 %v108, %v113
      %v115 = vadd.f32 %v105, %v114
      %116 = vset.pattern.permute.xlu0 3
      %117 = vperm.xlu0 %116, %v83
      %v118 = vpop.permute.xlu0 %117
      %v120 = vlaneseq
      %v121 = vshrl.u32 %v120, 7
      %v122 = vsub.s32 3, %v121
      %v123 = vrot.slane %v84, %v122
      %v124 = vmul.f32 %v118, %v123
      %v125 = vadd.f32 %v115, %v124
      %v126 = vld [vmem:[%s2] sm:$0x1]
      %v128 = vlaneseq
      %v129 = vshrl.u32 %v128, 7
      %v130 = vsub.s32 0, %v129
      %v131 = vrot.slane %v126, %v130
      %v133 = vadd.f32 %v125, %v131
      %v134 = vmax.f32 %v133, 0.0
      %v135 = vld [vmem:[%s3] sm:$0x3]
      %137 = vset.pattern.permute.xlu0 0
      %138 = vperm.xlu0 %137, %v134
      %v139 = vpop.permute.xlu0 %138
      %v141 = vlaneseq
      %v142 = vshrl.u32 %v141, 7
      %v143 = vsub.s32 0, %v142
      %v144 = vrot.slane %v135, %v143
      %v145 = vmul.f32 %v139, %v144
      %v146 = vadd.f32 %v145, 0.0
      %147 = vset.pattern.permute.xlu0 1
      %148 = vperm.xlu0 %147, %v134
      %v149 = vpop.permute.xlu0 %148
      %v151 = vlaneseq
      %v152 = vshrl.u32 %v151, 7
      %v153 = vsub.s32 1, %v152
      %v154 = vrot.slane %v135, %v153
      %v155 = vmul.f32 %v149, %v154
      %v156 = vadd.f32 %v146, %v155
      %v157 = vld [vmem:[%s4] sm:$0x1]
      %v159 = vlaneseq
      %v160 = vshrl.u32 %v159, 7
      %v161 = vsub.s32 0, %v160
      %v162 = vrot.slane %v157, %v161
      %v164 = vadd.f32 %v156, %v162
      %v165 = vsub.f32 0.0, %v164
      %v166 = vmul.f32 %v165, 1.442695
      %v167 = vpow.pop %v166
      %v168 = vadd.f32 %v167, 1.0
      %v169 = vrcp.pop %v168
      %v170 = vmul.f32 1.0, %v169
      %171 = vst.msk [vmem:[#allocation6] sm:$0x3] %vm77, %v170
    $region33: #{tpu_custom_call.1} parent=1 // pred_fallthru
      _
    // Predicated region
    $region34: #{tpu_custom_call.1} parent=1 // pred_check
      _
    $region35: #{tpu_custom_call.1} parent=1 // pred_check_branch
      %173 = sbr.rel (0) target = $region37
    $region36: #{tpu_custom_call.1} parent=1 // pred_region
      %s175 = ssub.s32 32, 32
      %176 = vsyncadd [#allocation5], %s175
      %s178 = sshll.u32 [#allocation6], 4
      %s179 = int_to_ptr.vmem [resolvable:$true] %s178
      %181 = dma.vmem_to_hbm [thread:$0]  %s179, 32, %s5, [#allocation5]
    $region37: #{tpu_custom_call.1} parent=1 // pred_fallthru
      _
    // Predicated region
    $region38: #{tpu_custom_call.1} parent=1 // pred_check
      _
    $region39: #{tpu_custom_call.1} parent=1 // pred_check_branch
      %183 = sbr.rel (0) target = $region41
    $region40: #{tpu_custom_call.1} parent=1 // pred_region
      %184 = dma.done [#allocation5], 32
    $region41: #{tpu_custom_call.1} parent=1 // pred_fallthru
      _
    %185 = vsyncpa [#allocation4], 1
    %186 = vsyncpa [#allocation5], 1

</llo_original>
